<compile_context>
chip_gen: v7x
topology: tpu7x:2x2x1
jax: 0.10.0
libtpu: 0.0.40
codegen_flags: <defaults>
</compile_context>

<pallas_src>
import functools

import jax
import jax.numpy as jnp
import numpy as np
from jax.experimental import pallas as pl
from jax.experimental.pallas import tpu as pltpu

# nn.Dropout(0.4), nn.Dropout(0.3), nn.Dropout(0.2)
_DROP_RATES = (0.4, 0.3, 0.2)
_OUT_PAD = 128  # real output width is 2; padded for lane-dense stores


def _round_up(n, m):
    return ((n + m - 1) // m) * m


def _keep_mask(shape, seed_i32, salt, row0, p):
    """Hash-based Bernoulli(1-p) keep mask. Pure jnp integer ops -> lowers on
    both Mosaic TPU and the CPU interpreter. Integer-threshold compare (no
    uint->float convert)."""
    rows = jax.lax.broadcasted_iota(jnp.int32, shape, 0) + row0
    cols = jax.lax.broadcasted_iota(jnp.int32, shape, 1)
    x = (rows.astype(jnp.uint32) * jnp.uint32(0x85EBCA6B)
         + cols.astype(jnp.uint32) * jnp.uint32(0xC2B2AE35)
         + seed_i32.astype(jnp.uint32) * jnp.uint32(0x9E3779B9)
         + jnp.uint32(salt))
    # murmur3-style finalizer
    x = x ^ (x >> 16)
    x = x * jnp.uint32(0x7FEB352D)
    x = x ^ (x >> 15)
    x = x * jnp.uint32(0x846CA68B)
    x = x ^ (x >> 16)
    r = (x & jnp.uint32(0x7FFFFFFF)).astype(jnp.int32)
    return r >= jnp.int32(int(p * 2147483648.0))  # keep-prob = 1 - p


def fnn_kernel(seed_ref, x_ref,
               w1_ref, b1_ref, w2_ref, b2_ref, w3_ref, b3_ref, w4_ref, b4_ref,
               o_ref, *, training: bool, block_m: int):
    row0 = pl.program_id(0) * block_m  # global row offset -> per-tile RNG

    def layer(h_bf16, w_ref, b_ref, drop_idx):
        acc = (jnp.dot(h_bf16, w_ref[...], preferred_element_type=jnp.float32)
               + b_ref[...])
        if training and drop_idx is not None:
            keep = _keep_mask(acc.shape, seed_ref[0], 0x7F4A7C15 + drop_idx,
                              row0, _DROP_RATES[drop_idx])
            # 1/(1-p) scale is pre-folded into the next layer's weights.
            acc = jnp.where(keep, acc, 0.0)
        return acc

    h = x_ref[...].astype(jnp.bfloat16)
    # Linear(in, 256) -> Dropout(0.4) -> ReLU
    h = jnp.maximum(layer(h, w1_ref, b1_ref, 0), 0.0).astype(jnp.bfloat16)
    # Linear(256, 64 [pad 128]) -> Dropout(0.3) -> ReLU
    h = jnp.maximum(layer(h, w2_ref, b2_ref, 1), 0.0).astype(jnp.bfloat16)
    # Linear(64, 32 [pad 128]) -> Dropout(0.2) -> ReLU
    h = jnp.maximum(layer(h, w3_ref, b3_ref, 2), 0.0).astype(jnp.bfloat16)
    # Linear(32, 2 [pad 128])
    o_ref[...] = layer(h, w4_ref, b4_ref, None)


def init_params(key, input_size):
    """Raw f32 params, stored (in, out) (transposed vs torch), torch-like init."""
    dims = [(input_size, 256), (256, 64), (64, 32), (32, 2)]
    params = []
    for fan_in, fan_out in dims:
        key, kw, kb = jax.random.split(key, 3)
        bound = 1.0 / np.sqrt(fan_in)
        w = jax.random.uniform(kw, (fan_in, fan_out), jnp.float32, -bound, bound)
        b = jax.random.uniform(kb, (1, fan_out), jnp.float32, -bound, bound)
        params += [w, b]
    return tuple(params)


def prepare_params(raw_params, *, training: bool):
    """One-time prep: fold dropout scales into next-layer weights (training),
    zero-pad narrow layers to lane width 128, cast weights to bf16."""
    w1, b1, w2, b2, w3, b3, w4, b4 = raw_params
    if training:
        w2 = w2 * (1.0 / (1.0 - _DROP_RATES[0]))
        w3 = w3 * (1.0 / (1.0 - _DROP_RATES[1]))
        w4 = w4 * (1.0 / (1.0 - _DROP_RATES[2]))

    def pad_to(a, shape):
        return jnp.zeros(shape, a.dtype).at[:a.shape[0], :a.shape[1]].set(a)

    w2 = pad_to(w2, (256, 128)); b2 = pad_to(b2, (1, 128))
    w3 = pad_to(w3, (128, 128)); b3 = pad_to(b3, (1, 128))
    w4 = pad_to(w4, (128, _OUT_PAD)); b4 = pad_to(b4, (1, _OUT_PAD))
    return (w1.astype(jnp.bfloat16), b1,
            w2.astype(jnp.bfloat16), b2,
            w3.astype(jnp.bfloat16), b3,
            w4.astype(jnp.bfloat16), b4)


def fnn_forward(x, prepared_params, *, seed=0, training=False, block_m=None):
    """Fused FNNWithDropout forward pass, one pallas_call with a batch grid."""
    batch, in_dim = x.shape
    if block_m is None:
        block_m = min(256, _round_up(batch, 8))   # MXU-aligned M tile, capped
    padded = _round_up(batch, block_m)
    if padded != batch:
        x = jnp.zeros((padded, in_dim), x.dtype).at[:batch].set(x)

    w1, b1, w2, b2, w3, b3, w4, b4 = prepared_params
    seed_arr = jnp.array([seed], dtype=jnp.int32)
    kernel = functools.partial(fnn_kernel, training=training, block_m=block_m)

    def wspec(arr):  # weights/biases: one block, VMEM-resident across the grid
        return pl.BlockSpec(arr.shape, lambda i, s: (0, 0))

    grid_spec = pltpu.PrefetchScalarGridSpec(
        num_scalar_prefetch=1,                     # seed -> SMEM
        grid=(padded // block_m,),
        in_specs=[
            pl.BlockSpec((block_m, in_dim), lambda i, s: (i, 0)),   # x tile
            wspec(w1), wspec(b1),
            wspec(w2), wspec(b2),
            wspec(w3), wspec(b3),
            wspec(w4), wspec(b4),
        ],
        out_specs=pl.BlockSpec((block_m, _OUT_PAD), lambda i, s: (i, 0)),
    )

    out = pl.pallas_call(
        kernel,
        out_shape=jax.ShapeDtypeStruct((padded, _OUT_PAD), jnp.float32),
        grid_spec=grid_spec,
        compiler_params=pltpu.CompilerParams(
            dimension_semantics=("parallel",),      # megacore on v7x
            vmem_limit_bytes=64 * 1024 * 1024,
        ),
    )(seed_arr, x, w1, b1, w2, b2, w3, b3, w4, b4)
    return out[:batch, :2]


def reference_eval(x, raw_params):
    """Pure-JAX eval-mode reference (dropout = identity), bf16 dots like the kernel."""
    w1, b1, w2, b2, w3, b3, w4, b4 = raw_params

    def lin(h, w, b):
        return jnp.dot(h.astype(jnp.bfloat16), w.astype(jnp.bfloat16),
                       preferred_element_type=jnp.float32) + b

    h = jnp.maximum(lin(x, w1, b1), 0.0)
    h = jnp.maximum(lin(h, w2, b2), 0.0)
    h = jnp.maximum(lin(h, w3, b3), 0.0)
    return lin(h, w4, b4)


if __name__ == "__main__":
    key = jax.random.PRNGKey(0)
    key, kx = jax.random.split(key)

    batch, input_size = 8, 32
    x = jax.random.normal(kx, (batch, input_size), jnp.float32)
    raw_params = init_params(key, input_size)

    # Eval mode (dropout disabled) — must match the pure-JAX reference.
    eval_params = prepare_params(raw_params, training=False)
    out_eval = jax.block_until_ready(fnn_forward(x, eval_params, training=False))
    ref = reference_eval(x, raw_params)
    np.testing.assert_allclose(np.asarray(out_eval), np.asarray(ref),
                               rtol=2e-3, atol=2e-3)
    assert out_eval.shape == (batch, 2)

    # Training mode (in-kernel hash-PRNG dropout) — shape/finiteness check only.
    train_params = prepare_params(raw_params, training=True)
    out_train = jax.block_until_ready(
        fnn_forward(x, train_params, seed=123, training=True))
    assert out_train.shape == (batch, 2)
    assert bool(jnp.all(jnp.isfinite(out_train)))

    print("KERNEL_OK")
</pallas_src>

<mosaic_0001>
module attributes {stable_mosaic.version = 11 : i64} {
  func.func @fnn_kernel(%arg0: i32, %arg1: memref<1xi32, #tpu.memory_space<smem>>, %arg2: memref<8x32xf32, #tpu.memory_space<vmem>>, %arg3: memref<32x256xbf16, #tpu.memory_space<vmem>>, %arg4: memref<1x256xf32, #tpu.memory_space<vmem>>, %arg5: memref<256x128xbf16, #tpu.memory_space<vmem>>, %arg6: memref<1x128xf32, #tpu.memory_space<vmem>>, %arg7: memref<128x128xbf16, #tpu.memory_space<vmem>>, %arg8: memref<1x128xf32, #tpu.memory_space<vmem>>, %arg9: memref<128x128xbf16, #tpu.memory_space<vmem>>, %arg10: memref<1x128xf32, #tpu.memory_space<vmem>>, %arg11: memref<8x128xf32, #tpu.memory_space<vmem>>) attributes {dimension_semantics = [#tpu.dimension_semantics<parallel>], iteration_bounds = array<i64: 1>, scalar_prefetch = 1 : i64, scratch_operands = 0 : i64, tpu.core_type = #tpu.core_type<tc>, window_params = [{transform_indices = @transform_0, window_bounds = array<i64: 8, 32>}, {pipeline_mode = #tpu.pipeline_mode<synchronous>, transform_indices = @transform_1, window_bounds = array<i64: 32, 256>}, {pipeline_mode = #tpu.pipeline_mode<synchronous>, transform_indices = @transform_2, window_bounds = array<i64: 1, 256>}, {pipeline_mode = #tpu.pipeline_mode<synchronous>, transform_indices = @transform_3, window_bounds = array<i64: 256, 128>}, {pipeline_mode = #tpu.pipeline_mode<synchronous>, transform_indices = @transform_4, window_bounds = array<i64: 1, 128>}, {pipeline_mode = #tpu.pipeline_mode<synchronous>, transform_indices = @transform_5, window_bounds = array<i64: 128, 128>}, {pipeline_mode = #tpu.pipeline_mode<synchronous>, transform_indices = @transform_6, window_bounds = array<i64: 1, 128>}, {pipeline_mode = #tpu.pipeline_mode<synchronous>, transform_indices = @transform_7, window_bounds = array<i64: 128, 128>}, {pipeline_mode = #tpu.pipeline_mode<synchronous>, transform_indices = @transform_8, window_bounds = array<i64: 1, 128>}, {transform_indices = @transform_9, window_bounds = array<i64: 8, 128>}]} {
    %c0 = arith.constant 0 : index
    %c0_0 = arith.constant 0 : index
    %0 = vector.load %arg2[%c0, %c0_0] : memref<8x32xf32, #tpu.memory_space<vmem>>, vector<8x32xf32>
    %1 = arith.truncf %0 : vector<8x32xf32> to vector<8x32xbf16>
    %c0_1 = arith.constant 0 : index
    %c0_2 = arith.constant 0 : index
    %2 = vector.load %arg3[%c0_1, %c0_2] : memref<32x256xbf16, #tpu.memory_space<vmem>>, vector<32x256xbf16>
    %cst = arith.constant dense<0.000000e+00> : vector<8x256xf32>
    %3 = tpu.matmul %1, %2, %cst {dimension_numbers = #tpu.dot_dimension_numbers<[1], [0], [0], [1], [0, 0, 1, 1], [], []>} : vector<8x32xbf16>, vector<32x256xbf16>, vector<8x256xf32> -> vector<8x256xf32>
    %c0_3 = arith.constant 0 : index
    %c0_4 = arith.constant 0 : index
    %4 = vector.load %arg4[%c0_3, %c0_4] : memref<1x256xf32, #tpu.memory_space<vmem>>, vector<1x256xf32>
    %5 = vector.broadcast %4 : vector<1x256xf32> to vector<8x256xf32>
    %6 = arith.addf %3, %5 : vector<8x256xf32>
    %cst_5 = arith.constant 0.000000e+00 : f32
    %7 = vector.broadcast %cst_5 : f32 to vector<8x256xf32>
    %8 = arith.maximumf %6, %7 : vector<8x256xf32>
    %9 = arith.truncf %8 : vector<8x256xf32> to vector<8x256xbf16>
    %c0_6 = arith.constant 0 : index
    %c0_7 = arith.constant 0 : index
    %10 = vector.load %arg5[%c0_6, %c0_7] : memref<256x128xbf16, #tpu.memory_space<vmem>>, vector<256x128xbf16>
    %cst_8 = arith.constant dense<0.000000e+00> : vector<8x128xf32>
    %11 = tpu.matmul %9, %10, %cst_8 {dimension_numbers = #tpu.dot_dimension_numbers<[1], [0], [0], [1], [0, 0, 1, 1], [], []>} : vector<8x256xbf16>, vector<256x128xbf16>, vector<8x128xf32> -> vector<8x128xf32>
    %c0_9 = arith.constant 0 : index
    %c0_10 = arith.constant 0 : index
    %12 = vector.load %arg6[%c0_9, %c0_10] : memref<1x128xf32, #tpu.memory_space<vmem>>, vector<1x128xf32>
    %13 = vector.broadcast %12 : vector<1x128xf32> to vector<8x128xf32>
    %14 = arith.addf %11, %13 : vector<8x128xf32>
    %cst_11 = arith.constant 0.000000e+00 : f32
    %15 = vector.broadcast %cst_11 : f32 to vector<8x128xf32>
    %16 = arith.maximumf %14, %15 : vector<8x128xf32>
    %17 = arith.truncf %16 : vector<8x128xf32> to vector<8x128xbf16>
    %c0_12 = arith.constant 0 : index
    %c0_13 = arith.constant 0 : index
    %18 = vector.load %arg7[%c0_12, %c0_13] : memref<128x128xbf16, #tpu.memory_space<vmem>>, vector<128x128xbf16>
    %cst_14 = arith.constant dense<0.000000e+00> : vector<8x128xf32>
    %19 = tpu.matmul %17, %18, %cst_14 {dimension_numbers = #tpu.dot_dimension_numbers<[1], [0], [0], [1], [0, 0, 1, 1], [], []>} : vector<8x128xbf16>, vector<128x128xbf16>, vector<8x128xf32> -> vector<8x128xf32>
    %c0_15 = arith.constant 0 : index
    %c0_16 = arith.constant 0 : index
    %20 = vector.load %arg8[%c0_15, %c0_16] : memref<1x128xf32, #tpu.memory_space<vmem>>, vector<1x128xf32>
    %21 = vector.broadcast %20 : vector<1x128xf32> to vector<8x128xf32>
    %22 = arith.addf %19, %21 : vector<8x128xf32>
    %cst_17 = arith.constant 0.000000e+00 : f32
    %23 = vector.broadcast %cst_17 : f32 to vector<8x128xf32>
    %24 = arith.maximumf %22, %23 : vector<8x128xf32>
    %25 = arith.truncf %24 : vector<8x128xf32> to vector<8x128xbf16>
    %c0_18 = arith.constant 0 : index
    %c0_19 = arith.constant 0 : index
    %26 = vector.load %arg9[%c0_18, %c0_19] : memref<128x128xbf16, #tpu.memory_space<vmem>>, vector<128x128xbf16>
    %cst_20 = arith.constant dense<0.000000e+00> : vector<8x128xf32>
    %27 = tpu.matmul %25, %26, %cst_20 {dimension_numbers = #tpu.dot_dimension_numbers<[1], [0], [0], [1], [0, 0, 1, 1], [], []>} : vector<8x128xbf16>, vector<128x128xbf16>, vector<8x128xf32> -> vector<8x128xf32>
    %c0_21 = arith.constant 0 : index
    %c0_22 = arith.constant 0 : index
    %28 = vector.load %arg10[%c0_21, %c0_22] : memref<1x128xf32, #tpu.memory_space<vmem>>, vector<1x128xf32>
    %29 = vector.broadcast %28 : vector<1x128xf32> to vector<8x128xf32>
    %30 = arith.addf %27, %29 : vector<8x128xf32>
    %c0_23 = arith.constant 0 : index
    %c0_24 = arith.constant 0 : index
    %31 = vector.load %arg11[%c0_23, %c0_24] : memref<8x128xf32, #tpu.memory_space<vmem>>, vector<8x128xf32>
    tpu.vector_store %arg11[%c0_23, %c0_24], %30 {strides = array<i32>} : memref<8x128xf32, #tpu.memory_space<vmem>>, vector<8x128xf32>,
    return
  }
  func.func @transform_0(%arg0: i32, %arg1: memref<1xi32, #tpu.memory_space<smem>>) -> (i32, i32) {
    %c0_i32 = arith.constant 0 : i32
    %c0_i32_0 = arith.constant 0 : i32
    return %arg0, %c0_i32 : i32, i32
  }
  func.func @transform_1(%arg0: i32, %arg1: memref<1xi32, #tpu.memory_space<smem>>) -> (i32, i32) {
    %c0_i32 = arith.constant 0 : i32
    %c0_i32_0 = arith.constant 0 : i32
    %c0_i32_1 = arith.constant 0 : i32
    return %c0_i32, %c0_i32_0 : i32, i32
  }
  func.func @transform_2(%arg0: i32, %arg1: memref<1xi32, #tpu.memory_space<smem>>) -> (i32, i32) {
    %c0_i32 = arith.constant 0 : i32
    %c0_i32_0 = arith.constant 0 : i32
    %c0_i32_1 = arith.constant 0 : i32
    return %c0_i32, %c0_i32_0 : i32, i32
  }
  func.func @transform_3(%arg0: i32, %arg1: memref<1xi32, #tpu.memory_space<smem>>) -> (i32, i32) {
    %c0_i32 = arith.constant 0 : i32
    %c0_i32_0 = arith.constant 0 : i32
    %c0_i32_1 = arith.constant 0 : i32
    return %c0_i32, %c0_i32_0 : i32, i32
  }
  func.func @transform_4(%arg0: i32, %arg1: memref<1xi32, #tpu.memory_space<smem>>) -> (i32, i32) {
    %c0_i32 = arith.constant 0 : i32
    %c0_i32_0 = arith.constant 0 : i32
    %c0_i32_1 = arith.constant 0 : i32
    return %c0_i32, %c0_i32_0 : i32, i32
  }
  func.func @transform_5(%arg0: i32, %arg1: memref<1xi32, #tpu.memory_space<smem>>) -> (i32, i32) {
    %c0_i32 = arith.constant 0 : i32
    %c0_i32_0 = arith.constant 0 : i32
    %c0_i32_1 = arith.constant 0 : i32
    return %c0_i32, %c0_i32_0 : i32, i32
  }
  func.func @transform_6(%arg0: i32, %arg1: memref<1xi32, #tpu.memory_space<smem>>) -> (i32, i32) {
    %c0_i32 = arith.constant 0 : i32
    %c0_i32_0 = arith.constant 0 : i32
    %c0_i32_1 = arith.constant 0 : i32
    return %c0_i32, %c0_i32_0 : i32, i32
  }
  func.func @transform_7(%arg0: i32, %arg1: memref<1xi32, #tpu.memory_space<smem>>) -> (i32, i32) {
    %c0_i32 = arith.constant 0 : i32
    %c0_i32_0 = arith.constant 0 : i32
    %c0_i32_1 = arith.constant 0 : i32
    return %c0_i32, %c0_i32_0 : i32, i32
  }
  func.func @transform_8(%arg0: i32, %arg1: memref<1xi32, #tpu.memory_space<smem>>) -> (i32, i32) {
    %c0_i32 = arith.constant 0 : i32
    %c0_i32_0 = arith.constant 0 : i32
    %c0_i32_1 = arith.constant 0 : i32
    return %c0_i32, %c0_i32_0 : i32, i32
  }
  func.func @transform_9(%arg0: i32, %arg1: memref<1xi32, #tpu.memory_space<smem>>) -> (i32, i32) {
    %c0_i32 = arith.constant 0 : i32
    %c0_i32_0 = arith.constant 0 : i32
    return %arg0, %c0_i32 : i32, i32
  }
}

</mosaic_0001>

<llo_original>
// kernel: tpu_custom_call.1
$region0: #{tpu_custom_call.1}
  #allocation0 [shape = 'u32[]', space=smem, size = 0x4, offset = 0x4, fixed_abs, tag = 'smem constant byte address 0x4 - core index']
  #allocation1 [shape = 'u32[144,128]{1,0:T(1,128)}', space=vmem, size = 0x12000, scoped, tag = 'internal scratch']
  #allocation2 [shape = 's32[1]{0}', space=sflag, size = 0x4, scoped, tag = 'scoped memory for tpu_custom_call.1']
  #allocation3 [shape = 's32[1]{0:T(128)S(6)}', space=smem, size = 0x200, scoped, tag = 'prefetched SMEM operand 0']
  %s0 = inlined_call_operand.<no memory space> [shape: s32[1], index: 0, kind: input, shape index: {}]
  %s1 = inlined_call_operand.hbm [shape: f32[8,32], index: 1, kind: input, shape index: {}]
  %s2 = inlined_call_operand.hbm [shape: bf16[32,256], index: 2, kind: input, shape index: {}]
  %s3 = inlined_call_operand.hbm [shape: f32[1,256], index: 3, kind: input, shape index: {}]
  %s4 = inlined_call_operand.hbm [shape: bf16[256,128], index: 4, kind: input, shape index: {}]
  %s5 = inlined_call_operand.hbm [shape: f32[1,128], index: 5, kind: input, shape index: {}]
  %s6 = inlined_call_operand.hbm [shape: bf16[128,128], index: 6, kind: input, shape index: {}]
  %s7 = inlined_call_operand.hbm [shape: f32[1,128], index: 7, kind: input, shape index: {}]
  %s8 = inlined_call_operand.hbm [shape: bf16[128,128], index: 8, kind: input, shape index: {}]
  %s9 = inlined_call_operand.hbm [shape: f32[1,128], index: 9, kind: input, shape index: {}]
  %s10 = inlined_call_operand.hbm [shape: f32[8,128], index: 10, kind: output, shape index: {}]
  %s11 = sld [smem:[#allocation0]]
  $region82: #{tpu_custom_call.1} parent=0
    _
  %s13 = ssub.s32 1, %s11
  %s14 = scalar_select 0, %s13, %s11
  %15 = sst [smem:[#allocation3]] %s0
  $region1: #{tpu_custom_call.1} parent=0
    #allocation4 [shape = 'u8[4096]{0}', space=vmem, size = 0x1000, scoped, tag = 'input window, operand 1, single buffered']
    #allocation5 [shape = 's32[1]{0}', space=sflag, size = 0x4, scoped, tag = 'scoped memory for tpu_custom_call.1']
    #allocation6 [shape = 's32[1]{0}', space=sflag, size = 0x4, scoped, tag = 'scoped memory for tpu_custom_call.1']
    #allocation7 [shape = 'u8[16384]{0}', space=vmem, size = 0x4000, scoped, tag = 'input window, operand 2, single buffered']
    #allocation8 [shape = 's32[1]{0}', space=sflag, size = 0x4, scoped, tag = 'scoped memory for tpu_custom_call.1']
    #allocation9 [shape = 'u8[1024]{0}', space=vmem, size = 0x400, scoped, tag = 'input window, operand 3, single buffered']
    #allocation10 [shape = 'u8[65536]{0}', space=vmem, size = 0x10000, scoped, tag = 'input window, operand 4, single buffered']
    #allocation11 [shape = 's32[1]{0}', space=sflag, size = 0x4, scoped, tag = 'scoped memory for tpu_custom_call.1']
    #allocation12 [shape = 'u8[512]{0}', space=vmem, size = 0x400, scoped, tag = 'input window, operand 5, single buffered']
    #allocation13 [shape = 'u8[32768]{0}', space=vmem, size = 0x8000, scoped, tag = 'input window, operand 6, single buffered']
    #allocation14 [shape = 's32[1]{0}', space=sflag, size = 0x4, scoped, tag = 'scoped memory for tpu_custom_call.1']
    #allocation15 [shape = 'u8[512]{0}', space=vmem, size = 0x400, scoped, tag = 'input window, operand 7, single buffered']
    #allocation16 [shape = 'u8[32768]{0}', space=vmem, size = 0x8000, scoped, tag = 'input window, operand 8, single buffered']
    #allocation17 [shape = 's32[1]{0}', space=sflag, size = 0x4, scoped, tag = 'scoped memory for tpu_custom_call.1']
    #allocation18 [shape = 'u8[512]{0}', space=vmem, size = 0x400, scoped, tag = 'input window, operand 9, single buffered']
    #allocation19 [shape = 'u8[4096]{0}', space=vmem, size = 0x1000, scoped, tag = 'output window, operand 0, single buffered']
    %16 = vsyncpa [#allocation5], 0
    %17 = vsyncpa [#allocation8], 0
    %18 = vsyncpa [#allocation11], 0
    %19 = vsyncpa [#allocation14], 0
    %20 = vsyncpa [#allocation17], 0
    %21 = vsyncpa [#allocation6], 0
    // Predicated region
    $region2: #{tpu_custom_call.1} parent=1 // pred_check
      _
    $region3: #{tpu_custom_call.1} parent=1 // pred_check_branch
      %23 = sbr.rel (0) target = $region5
    $region4: #{tpu_custom_call.1} parent=1 // pred_region
      %s25 = ssub.s32 128, 128
      %26 = vsyncadd [#allocation5], %s25
      %s28 = sshll.u32 [#allocation4], 4
      %s29 = int_to_ptr.vmem [resolvable:$true] %s28
      %31 = dma.hbm_to_vmem [thread:$0]  %s1, 128, %s29, [#allocation5]
    $region5: #{tpu_custom_call.1} parent=1 // pred_fallthru
      _
    // Predicated region
    $region6: #{tpu_custom_call.1} parent=1 // pred_check
      _
    $region7: #{tpu_custom_call.1} parent=1 // pred_check_branch
      %33 = sbr.rel (0) target = $region9
    $region8: #{tpu_custom_call.1} parent=1 // pred_region
      %s35 = ssub.s32 512, 512
      %36 = vsyncadd [#allocation8], %s35
      %s37 = sshll.u32 [#allocation7], 4
      %s38 = int_to_ptr.vmem [resolvable:$true] %s37
      %43 = dma.hbm_to_vmem [thread:$0]  %s2, 512, %s38, [#allocation8], 128, 128, 8
    $region9: #{tpu_custom_call.1} parent=1 // pred_fallthru
      _
    // Predicated region
    $region10: #{tpu_custom_call.1} parent=1 // pred_check
      _
    $region11: #{tpu_custom_call.1} parent=1 // pred_check_branch
      %45 = sbr.rel (0) target = $region13
    $region12: #{tpu_custom_call.1} parent=1 // pred_region
      %s47 = ssub.s32 32, 32
      %48 = vsyncadd [#allocation8], %s47
      %s50 = sshll.u32 [#allocation9], 4
      %s51 = int_to_ptr.vmem [resolvable:$true] %s50
      %53 = dma.hbm_to_vmem [thread:$0]  %s3, 32, %s51, [#allocation8]
    $region13: #{tpu_custom_call.1} parent=1 // pred_fallthru
      _
    // Predicated region
    $region14: #{tpu_custom_call.1} parent=1 // pred_check
      _
    $region15: #{tpu_custom_call.1} parent=1 // pred_check_branch
      %55 = sbr.rel (0) target = $region17
    $region16: #{tpu_custom_call.1} parent=1 // pred_region
      %s57 = ssub.s32 2048, 2048
      %58 = vsyncadd [#allocation11], %s57
      %s59 = sshll.u32 [#allocation10], 4
      %s60 = int_to_ptr.vmem [resolvable:$true] %s59
      %65 = dma.hbm_to_vmem [thread:$0]  %s4, 2048, %s60, [#allocation11], 64, 64, 4
    $region17: #{tpu_custom_call.1} parent=1 // pred_fallthru
      _
    // Predicated region
    $region18: #{tpu_custom_call.1} parent=1 // pred_check
      _
    $region19: #{tpu_custom_call.1} parent=1 // pred_check_branch
      %67 = sbr.rel (0) target = $region21
    $region20: #{tpu_custom_call.1} parent=1 // pred_region
      %s69 = ssub.s32 16, 16
      %70 = vsyncadd [#allocation11], %s69
      %s72 = sshll.u32 [#allocation12], 4
      %s73 = int_to_ptr.vmem [resolvable:$true] %s72
      %75 = dma.hbm_to_vmem [thread:$0]  %s5, 16, %s73, [#allocation11]
    $region21: #{tpu_custom_call.1} parent=1 // pred_fallthru
      _
    // Predicated region
    $region22: #{tpu_custom_call.1} parent=1 // pred_check
      _
    $region23: #{tpu_custom_call.1} parent=1 // pred_check_branch
      %77 = sbr.rel (0) target = $region25
    $region24: #{tpu_custom_call.1} parent=1 // pred_region
      %s79 = ssub.s32 1024, 1024
      %80 = vsyncadd [#allocation14], %s79
      %s81 = sshll.u32 [#allocation13], 4
      %s82 = int_to_ptr.vmem [resolvable:$true] %s81
      %87 = dma.hbm_to_vmem [thread:$0]  %s6, 1024, %s82, [#allocation14], 64, 64, 4
    $region25: #{tpu_custom_call.1} parent=1 // pred_fallthru
      _
    // Predicated region
    $region26: #{tpu_custom_call.1} parent=1 // pred_check
      _
    $region27: #{tpu_custom_call.1} parent=1 // pred_check_branch
      %89 = sbr.rel (0) target = $region29
    $region28: #{tpu_custom_call.1} parent=1 // pred_region
      %s91 = ssub.s32 16, 16
      %92 = vsyncadd [#allocation14], %s91
      %s94 = sshll.u32 [#allocation15], 4
      %s95 = int_to_ptr.vmem [resolvable:$true] %s94
      %97 = dma.hbm_to_vmem [thread:$0]  %s7, 16, %s95, [#allocation14]
    $region29: #{tpu_custom_call.1} parent=1 // pred_fallthru
      _
    // Predicated region
    $region30: #{tpu_custom_call.1} parent=1 // pred_check
      _
    $region31: #{tpu_custom_call.1} parent=1 // pred_check_branch
      %99 = sbr.rel (0) target = $region33
    $region32: #{tpu_custom_call.1} parent=1 // pred_region
      %s101 = ssub.s32 1024, 1024
      %102 = vsyncadd [#allocation17], %s101
      %s103 = sshll.u32 [#allocation16], 4
      %s104 = int_to_ptr.vmem [resolvable:$true] %s103
      %109 = dma.hbm_to_vmem [thread:$0]  %s8, 1024, %s104, [#allocation17], 64, 64, 4
    $region33: #{tpu_custom_call.1} parent=1 // pred_fallthru
      _
    // Predicated region
    $region34: #{tpu_custom_call.1} parent=1 // pred_check
      _
    $region35: #{tpu_custom_call.1} parent=1 // pred_check_branch
      %111 = sbr.rel (0) target = $region37
    $region36: #{tpu_custom_call.1} parent=1 // pred_region
      %s113 = ssub.s32 16, 16
      %114 = vsyncadd [#allocation17], %s113
      %s116 = sshll.u32 [#allocation18], 4
      %s117 = int_to_ptr.vmem [resolvable:$true] %s116
      %119 = dma.hbm_to_vmem [thread:$0]  %s9, 16, %s117, [#allocation17]
    $region37: #{tpu_custom_call.1} parent=1 // pred_fallthru
      _
    // Predicated region
    $region38: #{tpu_custom_call.1} parent=1 // pred_check
      _
    $region39: #{tpu_custom_call.1} parent=1 // pred_check_branch
      %121 = sbr.rel (0) target = $region41
    $region40: #{tpu_custom_call.1} parent=1 // pred_region
      %122 = dma.done [#allocation5], 128
    $region41: #{tpu_custom_call.1} parent=1 // pred_fallthru
      _
    // Predicated region
    $region42: #{tpu_custom_call.1} parent=1 // pred_check
      _
    $region43: #{tpu_custom_call.1} parent=1 // pred_check_branch
      %124 = sbr.rel (0) target = $region45
    $region44: #{tpu_custom_call.1} parent=1 // pred_region
      %125 = dma.done [#allocation8], 512
    $region45: #{tpu_custom_call.1} parent=1 // pred_fallthru
      _
    // Predicated region
    $region46: #{tpu_custom_call.1} parent=1 // pred_check
      _
    $region47: #{tpu_custom_call.1} parent=1 // pred_check_branch
      %127 = sbr.rel (0) target = $region49
    $region48: #{tpu_custom_call.1} parent=1 // pred_region
      %128 = dma.done [#allocation8], 32
    $region49: #{tpu_custom_call.1} parent=1 // pred_fallthru
      _
    // Predicated region
    $region50: #{tpu_custom_call.1} parent=1 // pred_check
      _
    $region51: #{tpu_custom_call.1} parent=1 // pred_check_branch
      %130 = sbr.rel (0) target = $region53
    $region52: #{tpu_custom_call.1} parent=1 // pred_region
      %131 = dma.done [#allocation11], 2048
    $region53: #{tpu_custom_call.1} parent=1 // pred_fallthru
      _
    // Predicated region
    $region54: #{tpu_custom_call.1} parent=1 // pred_check
      _
    $region55: #{tpu_custom_call.1} parent=1 // pred_check_branch
      %133 = sbr.rel (0) target = $region57
    $region56: #{tpu_custom_call.1} parent=1 // pred_region
      %134 = dma.done [#allocation11], 16
    $region57: #{tpu_custom_call.1} parent=1 // pred_fallthru
      _
    // Predicated region
    $region58: #{tpu_custom_call.1} parent=1 // pred_check
      _
    $region59: #{tpu_custom_call.1} parent=1 // pred_check_branch
      %136 = sbr.rel (0) target = $region61
    $region60: #{tpu_custom_call.1} parent=1 // pred_region
      %137 = dma.done [#allocation14], 1024
    $region61: #{tpu_custom_call.1} parent=1 // pred_fallthru
      _
    // Predicated region
    $region62: #{tpu_custom_call.1} parent=1 // pred_check
      _
    $region63: #{tpu_custom_call.1} parent=1 // pred_check_branch
      %139 = sbr.rel (0) target = $region65
    $region64: #{tpu_custom_call.1} parent=1 // pred_region
      %140 = dma.done [#allocation14], 16
    $region65: #{tpu_custom_call.1} parent=1 // pred_fallthru
      _
    // Predicated region
    $region66: #{tpu_custom_call.1} parent=1 // pred_check
      _
    $region67: #{tpu_custom_call.1} parent=1 // pred_check_branch
      %142 = sbr.rel (0) target = $region69
    $region68: #{tpu_custom_call.1} parent=1 // pred_region
      %143 = dma.done [#allocation17], 1024
    $region69: #{tpu_custom_call.1} parent=1 // pred_fallthru
      _
    // Predicated region
    $region70: #{tpu_custom_call.1} parent=1 // pred_check
      _
    $region71: #{tpu_custom_call.1} parent=1 // pred_check_branch
      %145 = sbr.rel (0) target = $region73
    $region72: #{tpu_custom_call.1} parent=1 // pred_region
      %146 = dma.done [#allocation17], 16
    $region73: #{tpu_custom_call.1} parent=1 // pred_fallthru
      _
    %v148 = vld [vmem:[#allocation4] sm:$0xff]
    %v149 = vpack.c.bf16 %v148, %v148
    %v150 = vld [vmem:[#allocation7] sm:$0xff]
    %v151 = vld [vmem:[#allocation7 + $0x8] sm:$0xff]
    %v152 = vld [vmem:[#allocation7 + $0x10] sm:$0xff]
    %v153 = vld [vmem:[#allocation7 + $0x18] sm:$0xff]
    %v154 = vld [vmem:[#allocation9] sm:$0x3]
    %v156 = vlaneseq
    %v157 = vshrl.u32 %v156, 7
    %v158 = vsub.s32 0, %v157
    %v159 = vrot.slane %v154, %v158
    %v160 = vlaneseq
    %v161 = vshrl.u32 %v160, 7
    %v162 = vsub.s32 1, %v161
    %v163 = vrot.slane %v154, %v162
    %v170 = vunpack.c.l.b16 %v150
    %v171 = vunpack.c.h.b16 %v150
    %v172 = vunpack.c.l.b16 %v151
    %v173 = vunpack.c.h.b16 %v151
    %v174 = vunpack.c.l.b16 %v152
    %v175 = vunpack.c.h.b16 %v152
    %v176 = vunpack.c.l.b16 %v153
    %v177 = vunpack.c.h.b16 %v153
    %v178 = vpack.c.b16 %v172, %v170
    %v179 = vpack.c.b16 %v173, %v171
    %v180 = vpack.c.b16 %v176, %v174
    %v181 = vpack.c.b16 %v177, %v175
    %vm186 = vcmask 261120
    %v188 = vsel %vm186, %v149, 0
    %190 = vmatprep.subr.bf16.mxu0 %v179
    %191 = vmatpush1.bf16.msra.mxu0 %v178
    %192 = vmatprep.subr.bf16.mxu0 %v181
    %193 = vmatpush1.bf16.msra.mxu0 %v180
    %194 = vmatprep.subr.bf16.mxu0 0
    %195 = vmatpush1.bf16.msra.mxu0 0
    %196 = vmatprep.subr.bf16.mxu0 0
    %197 = vmatpush1.bf16.msra.mxu0 0
    %198 = vmatprep.subr.bf16.mxu0 0
    %199 = vmatpush1.bf16.msra.mxu0 0
    %200 = vmatprep.subr.bf16.mxu0 0
    %201 = vmatpush1.bf16.msra.mxu0 0
    %202 = vmatprep.subr.bf16.mxu0 0
    %203 = vmatpush1.bf16.msra.mxu0 0
    %204 = vmatprep.subr.bf16.mxu0 0
    %205 = vmatpush1.bf16.msra.mxu0 0
    %206 = vmatprep.subr.bf16.mxu0 0
    %207 = vmatpush1.bf16.msra.mxu0 0
    %208 = vmatprep.subr.bf16.mxu0 0
    %209 = vmatpush1.bf16.msra.mxu0 0
    %210 = vmatprep.subr.bf16.mxu0 0
    %211 = vmatpush1.bf16.msra.mxu0 0
    %212 = vmatprep.subr.bf16.mxu0 0
    %213 = vmatpush1.bf16.msra.mxu0 0
    %214 = vmatprep.subr.bf16.mxu0 0
    %215 = vmatpush1.bf16.msra.mxu0 0
    %216 = vmatprep.subr.bf16.mxu0 0
    %217 = vmatpush1.bf16.msra.mxu0 0
    %218 = vmatprep.subr.bf16.mxu0 0
    %219 = vmatpush1.bf16.msra.mxu0 0
    %220 = vmatprep.subr.bf16.mxu0 0
    %221 = vmatpush1.bf16.msra.mxu0 0
    %222 = vmatprep.mubr.bf16.mxu0 0
    %223 = vmatmul.mubr.bf16.gmra.mrb[0].mxu0 %v188
    %v224 = vpop.f32.mrb[0].mxu0
    %v225 = vadd.f32 %v159, %v224
    %v226 = vpop.f32.mrb[0].mxu0
    %v227 = vadd.f32 %v163, %v226
    %v228 = vpop.f32.mrb[0].mxu0
    %v229 = vpop.f32.mrb[0].mxu0
    %230 = vdwg.mxu0
    %v231 = vmax.f32 %v225, 0.0
    %v232 = vmax.f32 %v227, 0.0
    %v233 = vpack.c.bf16 %v231, %v231
    %v234 = vpack.c.bf16 %v232, %v232
    %v235 = vld [vmem:[#allocation10] sm:$0xf]
    %v236 = vld [vmem:[#allocation10 + $0x4] sm:$0xf]
    %v237 = vld [vmem:[#allocation10 + $0x8] sm:$0xf]
    %v238 = vld [vmem:[#allocation10 + $0xc] sm:$0xf]
    %v239 = vld [vmem:[#allocation10 + $0x10] sm:$0xf]
    %v240 = vld [vmem:[#allocation10 + $0x14] sm:$0xf]
    %v241 = vld [vmem:[#allocation10 + $0x18] sm:$0xf]
    %v242 = vld [vmem:[#allocation10 + $0x1c] sm:$0xf]
    %v243 = vld [vmem:[#allocation10 + $0x20] sm:$0xf]
    %v244 = vld [vmem:[#allocation10 + $0x24] sm:$0xf]
    %v245 = vld [vmem:[#allocation10 + $0x28] sm:$0xf]
    %v246 = vld [vmem:[#allocation10 + $0x2c] sm:$0xf]
    %v247 = vld [vmem:[#allocation10 + $0x30] sm:$0xf]
    %v248 = vld [vmem:[#allocation10 + $0x34] sm:$0xf]
    %v249 = vld [vmem:[#allocation10 + $0x38] sm:$0xf]
    %v250 = vld [vmem:[#allocation10 + $0x3c] sm:$0xf]
    %v251 = vld [vmem:[#allocation10 + $0x40] sm:$0xf]
    %v252 = vld [vmem:[#allocation10 + $0x44] sm:$0xf]
    %v253 = vld [vmem:[#allocation10 + $0x48] sm:$0xf]
    %v254 = vld [vmem:[#allocation10 + $0x4c] sm:$0xf]
    %v255 = vld [vmem:[#allocation10 + $0x50] sm:$0xf]
    %v256 = vld [vmem:[#allocation10 + $0x54] sm:$0xf]
    %v257 = vld [vmem:[#allocation10 + $0x58] sm:$0xf]
    %v258 = vld [vmem:[#allocation10 + $0x5c] sm:$0xf]
    %v259 = vld [vmem:[#allocation10 + $0x60] sm:$0xf]
    %v260 = vld [vmem:[#allocation10 + $0x64] sm:$0xf]
    %v261 = vld [vmem:[#allocation10 + $0x68] sm:$0xf]
    %v262 = vld [vmem:[#allocation10 + $0x6c] sm:$0xf]
    %v263 = vld [vmem:[#allocation10 + $0x70] sm:$0xf]
    %v264 = vld [vmem:[#allocation10 + $0x74] sm:$0xf]
    %v265 = vld [vmem:[#allocation10 + $0x78] sm:$0xf]
    %v266 = vld [vmem:[#allocation10 + $0x7c] sm:$0xf]
    %v267 = vld [vmem:[#allocation12] sm:$0x1]
    %v269 = vlaneseq
    %v270 = vshrl.u32 %v269, 7
    %v271 = vsub.s32 0, %v270
    %v272 = vrot.slane %v267, %v271
    %v306 = vunpack.c.l.b16 %v235
    %v307 = vunpack.c.l.b16 %v236
    %v308 = vunpack.c.l.b16 %v237
    %v309 = vunpack.c.l.b16 %v238
    %v310 = vunpack.c.l.b16 %v239
    %v311 = vunpack.c.l.b16 %v240
    %v312 = vunpack.c.l.b16 %v241
    %v313 = vunpack.c.l.b16 %v242
    %v314 = vunpack.c.l.b16 %v243
    %v315 = vunpack.c.l.b16 %v244
    %v316 = vunpack.c.l.b16 %v245
    %v317 = vunpack.c.l.b16 %v246
    %v318 = vunpack.c.l.b16 %v247
    %v319 = vunpack.c.l.b16 %v248
    %v320 = vunpack.c.l.b16 %v249
    %v321 = vunpack.c.l.b16 %v250
    %v322 = vunpack.c.l.b16 %v251
    %v323 = vunpack.c.l.b16 %v252
    %v324 = vunpack.c.l.b16 %v253
    %v325 = vunpack.c.l.b16 %v254
    %v326 = vunpack.c.l.b16 %v255
    %v327 = vunpack.c.l.b16 %v256
    %v328 = vunpack.c.l.b16 %v257
    %v329 = vunpack.c.l.b16 %v258
    %v330 = vunpack.c.l.b16 %v259
    %v331 = vunpack.c.l.b16 %v260
    %v332 = vunpack.c.l.b16 %v261
    %v333 = vunpack.c.l.b16 %v262
    %v334 = vunpack.c.l.b16 %v263
    %v335 = vunpack.c.l.b16 %v264
    %v336 = vunpack.c.l.b16 %v265
    %v337 = vunpack.c.l.b16 %v266
    %v338 = vpack.c.b16 %v307, %v306
    %v339 = vpack.c.b16 %v309, %v308
    %v340 = vpack.c.b16 %v311, %v310
    %v341 = vpack.c.b16 %v313, %v312
    %v342 = vpack.c.b16 %v315, %v314
    %v343 = vpack.c.b16 %v317, %v316
    %v344 = vpack.c.b16 %v319, %v318
    %v345 = vpack.c.b16 %v321, %v320
    %v346 = vpack.c.b16 %v323, %v322
    %v347 = vpack.c.b16 %v325, %v324
    %v348 = vpack.c.b16 %v327, %v326
    %v349 = vpack.c.b16 %v329, %v328
    %v350 = vpack.c.b16 %v331, %v330
    %v351 = vpack.c.b16 %v333, %v332
    %v352 = vpack.c.b16 %v335, %v334
    %v353 = vpack.c.b16 %v337, %v336
    %370 = vmatprep.subr.bf16.mxu0 0
    %371 = vmatpush1.bf16.msra.mxu0 %v338
    %372 = vmatprep.subr.bf16.mxu0 0
    %373 = vmatpush1.bf16.msra.mxu0 %v339
    %374 = vmatprep.subr.bf16.mxu0 0
    %375 = vmatpush1.bf16.msra.mxu0 %v340
    %376 = vmatprep.subr.bf16.mxu0 0
    %377 = vmatpush1.bf16.msra.mxu0 %v341
    %378 = vmatprep.subr.bf16.mxu0 0
    %379 = vmatpush1.bf16.msra.mxu0 %v342
    %380 = vmatprep.subr.bf16.mxu0 0
    %381 = vmatpush1.bf16.msra.mxu0 %v343
    %382 = vmatprep.subr.bf16.mxu0 0
    %383 = vmatpush1.bf16.msra.mxu0 %v344
    %384 = vmatprep.subr.bf16.mxu0 0
    %385 = vmatpush1.bf16.msra.mxu0 %v345
    %386 = vmatprep.subr.bf16.mxu0 0
    %387 = vmatpush1.bf16.msra.mxu0 %v346
    %388 = vmatprep.subr.bf16.mxu0 0
    %389 = vmatpush1.bf16.msra.mxu0 %v347
    %390 = vmatprep.subr.bf16.mxu0 0
    %391 = vmatpush1.bf16.msra.mxu0 %v348
    %392 = vmatprep.subr.bf16.mxu0 0
    %393 = vmatpush1.bf16.msra.mxu0 %v349
    %394 = vmatprep.subr.bf16.mxu0 0
    %395 = vmatpush1.bf16.msra.mxu0 %v350
    %396 = vmatprep.subr.bf16.mxu0 0
    %397 = vmatpush1.bf16.msra.mxu0 %v351
    %398 = vmatprep.subr.bf16.mxu0 0
    %399 = vmatpush1.bf16.msra.mxu0 %v352
    %400 = vmatprep.subr.bf16.mxu0 0
    %401 = vmatpush1.bf16.msra.mxu0 %v353
    %402 = vmatprep.mubr.bf16.mxu0 %v234
    %403 = vmatmul.mubr.bf16.gmra.mrb[0].mxu0 %v233
    %v404 = vpop.f32.mrb[0].mxu0
    %v405 = vadd.f32 %v272, %v404
    %v406 = vpop.f32.mrb[0].mxu0
    %v407 = vpop.f32.mrb[0].mxu0
    %v408 = vpop.f32.mrb[0].mxu0
    %409 = vdwg.mxu0
    %v410 = vmax.f32 %v405, 0.0
    %v411 = vpack.c.bf16 %v410, %v410
    %v412 = vld [vmem:[#allocation13] sm:$0xf]
    %v413 = vld [vmem:[#allocation13 + $0x4] sm:$0xf]
    %v414 = vld [vmem:[#allocation13 + $0x8] sm:$0xf]
    %v415 = vld [vmem:[#allocation13 + $0xc] sm:$0xf]
    %v416 = vld [vmem:[#allocation13 + $0x10] sm:$0xf]
    %v417 = vld [vmem:[#allocation13 + $0x14] sm:$0xf]
    %v418 = vld [vmem:[#allocation13 + $0x18] sm:$0xf]
    %v419 = vld [vmem:[#allocation13 + $0x1c] sm:$0xf]
    %v420 = vld [vmem:[#allocation13 + $0x20] sm:$0xf]
    %v421 = vld [vmem:[#allocation13 + $0x24] sm:$0xf]
    %v422 = vld [vmem:[#allocation13 + $0x28] sm:$0xf]
    %v423 = vld [vmem:[#allocation13 + $0x2c] sm:$0xf]
    %v424 = vld [vmem:[#allocation13 + $0x30] sm:$0xf]
    %v425 = vld [vmem:[#allocation13 + $0x34] sm:$0xf]
    %v426 = vld [vmem:[#allocation13 + $0x38] sm:$0xf]
    %v427 = vld [vmem:[#allocation13 + $0x3c] sm:$0xf]
    %v428 = vld [vmem:[#allocation15] sm:$0x1]
    %v430 = vlaneseq
    %v431 = vshrl.u32 %v430, 7
    %v432 = vsub.s32 0, %v431
    %v433 = vrot.slane %v428, %v432
    %v451 = vunpack.c.l.b16 %v412
    %v452 = vunpack.c.l.b16 %v413
    %v453 = vunpack.c.l.b16 %v414
    %v454 = vunpack.c.l.b16 %v415
    %v455 = vunpack.c.l.b16 %v416
    %v456 = vunpack.c.l.b16 %v417
    %v457 = vunpack.c.l.b16 %v418
    %v458 = vunpack.c.l.b16 %v419
    %v459 = vunpack.c.l.b16 %v420
    %v460 = vunpack.c.l.b16 %v421
    %v461 = vunpack.c.l.b16 %v422
    %v462 = vunpack.c.l.b16 %v423
    %v463 = vunpack.c.l.b16 %v424
    %v464 = vunpack.c.l.b16 %v425
    %v465 = vunpack.c.l.b16 %v426
    %v466 = vunpack.c.l.b16 %v427
    %v467 = vpack.c.b16 %v452, %v451
    %v468 = vpack.c.b16 %v454, %v453
    %v469 = vpack.c.b16 %v456, %v455
    %v470 = vpack.c.b16 %v458, %v457
    %v471 = vpack.c.b16 %v460, %v459
    %v472 = vpack.c.b16 %v462, %v461
    %v473 = vpack.c.b16 %v464, %v463
    %v474 = vpack.c.b16 %v466, %v465
    %483 = vmatprep.subr.bf16.mxu0 0
    %484 = vmatpush1.bf16.msra.mxu0 %v467
    %485 = vmatprep.subr.bf16.mxu0 0
    %486 = vmatpush1.bf16.msra.mxu0 %v468
    %487 = vmatprep.subr.bf16.mxu0 0
    %488 = vmatpush1.bf16.msra.mxu0 %v469
    %489 = vmatprep.subr.bf16.mxu0 0
    %490 = vmatpush1.bf16.msra.mxu0 %v470
    %491 = vmatprep.subr.bf16.mxu0 0
    %492 = vmatpush1.bf16.msra.mxu0 %v471
    %493 = vmatprep.subr.bf16.mxu0 0
    %494 = vmatpush1.bf16.msra.mxu0 %v472
    %495 = vmatprep.subr.bf16.mxu0 0
    %496 = vmatpush1.bf16.msra.mxu0 %v473
    %497 = vmatprep.subr.bf16.mxu0 0
    %498 = vmatpush1.bf16.msra.mxu0 %v474
    %499 = vmatprep.subr.bf16.mxu0 0
    %500 = vmatpush1.bf16.msra.mxu0 0
    %501 = vmatprep.subr.bf16.mxu0 0
    %502 = vmatpush1.bf16.msra.mxu0 0
    %503 = vmatprep.subr.bf16.mxu0 0
    %504 = vmatpush1.bf16.msra.mxu0 0
    %505 = vmatprep.subr.bf16.mxu0 0
    %506 = vmatpush1.bf16.msra.mxu0 0
    %507 = vmatprep.subr.bf16.mxu0 0
    %508 = vmatpush1.bf16.msra.mxu0 0
    %509 = vmatprep.subr.bf16.mxu0 0
    %510 = vmatpush1.bf16.msra.mxu0 0
    %511 = vmatprep.subr.bf16.mxu0 0
    %512 = vmatpush1.bf16.msra.mxu0 0
    %513 = vmatprep.subr.bf16.mxu0 0
    %514 = vmatpush1.bf16.msra.mxu0 0
    %515 = vmatprep.mubr.bf16.mxu0 0
    %516 = vmatmul.mubr.bf16.gmra.mrb[0].mxu0 %v411
    %v517 = vpop.f32.mrb[0].mxu0
    %v518 = vadd.f32 %v433, %v517
    %v519 = vpop.f32.mrb[0].mxu0
    %v520 = vpop.f32.mrb[0].mxu0
    %v521 = vpop.f32.mrb[0].mxu0
    %522 = vdwg.mxu0
    %v523 = vmax.f32 %v518, 0.0
    %v524 = vpack.c.bf16 %v523, %v523
    %v525 = vld [vmem:[#allocation16] sm:$0xf]
    %v526 = vld [vmem:[#allocation16 + $0x4] sm:$0xf]
    %v527 = vld [vmem:[#allocation16 + $0x8] sm:$0xf]
    %v528 = vld [vmem:[#allocation16 + $0xc] sm:$0xf]
    %v529 = vld [vmem:[#allocation16 + $0x10] sm:$0xf]
    %v530 = vld [vmem:[#allocation16 + $0x14] sm:$0xf]
    %v531 = vld [vmem:[#allocation16 + $0x18] sm:$0xf]
    %v532 = vld [vmem:[#allocation16 + $0x1c] sm:$0xf]
    %v533 = vld [vmem:[#allocation16 + $0x20] sm:$0xf]
    %v534 = vld [vmem:[#allocation16 + $0x24] sm:$0xf]
    %v535 = vld [vmem:[#allocation16 + $0x28] sm:$0xf]
    %v536 = vld [vmem:[#allocation16 + $0x2c] sm:$0xf]
    %v537 = vld [vmem:[#allocation16 + $0x30] sm:$0xf]
    %v538 = vld [vmem:[#allocation16 + $0x34] sm:$0xf]
    %v539 = vld [vmem:[#allocation16 + $0x38] sm:$0xf]
    %v540 = vld [vmem:[#allocation16 + $0x3c] sm:$0xf]
    %v541 = vld [vmem:[#allocation18] sm:$0x1]
    %v543 = vlaneseq
    %v544 = vshrl.u32 %v543, 7
    %v545 = vsub.s32 0, %v544
    %v546 = vrot.slane %v541, %v545
    %v564 = vunpack.c.l.b16 %v525
    %v565 = vunpack.c.l.b16 %v526
    %v566 = vunpack.c.l.b16 %v527
    %v567 = vunpack.c.l.b16 %v528
    %v568 = vunpack.c.l.b16 %v529
    %v569 = vunpack.c.l.b16 %v530
    %v570 = vunpack.c.l.b16 %v531
    %v571 = vunpack.c.l.b16 %v532
    %v572 = vunpack.c.l.b16 %v533
    %v573 = vunpack.c.l.b16 %v534
    %v574 = vunpack.c.l.b16 %v535
    %v575 = vunpack.c.l.b16 %v536
    %v576 = vunpack.c.l.b16 %v537
    %v577 = vunpack.c.l.b16 %v538
    %v578 = vunpack.c.l.b16 %v539
    %v579 = vunpack.c.l.b16 %v540
    %v580 = vpack.c.b16 %v565, %v564
    %v581 = vpack.c.b16 %v567, %v566
    %v582 = vpack.c.b16 %v569, %v568
    %v583 = vpack.c.b16 %v571, %v570
    %v584 = vpack.c.b16 %v573, %v572
    %v585 = vpack.c.b16 %v575, %v574
    %v586 = vpack.c.b16 %v577, %v576
    %v587 = vpack.c.b16 %v579, %v578
    %596 = vmatprep.subr.bf16.mxu0 0
    %597 = vmatpush1.bf16.msra.mxu0 %v580
    %598 = vmatprep.subr.bf16.mxu0 0
    %599 = vmatpush1.bf16.msra.mxu0 %v581
    %600 = vmatprep.subr.bf16.mxu0 0
    %601 = vmatpush1.bf16.msra.mxu0 %v582
    %602 = vmatprep.subr.bf16.mxu0 0
    %603 = vmatpush1.bf16.msra.mxu0 %v583
    %604 = vmatprep.subr.bf16.mxu0 0
    %605 = vmatpush1.bf16.msra.mxu0 %v584
    %606 = vmatprep.subr.bf16.mxu0 0
    %607 = vmatpush1.bf16.msra.mxu0 %v585
    %608 = vmatprep.subr.bf16.mxu0 0
    %609 = vmatpush1.bf16.msra.mxu0 %v586
    %610 = vmatprep.subr.bf16.mxu0 0
    %611 = vmatpush1.bf16.msra.mxu0 %v587
    %612 = vmatprep.subr.bf16.mxu0 0
    %613 = vmatpush1.bf16.msra.mxu0 0
    %614 = vmatprep.subr.bf16.mxu0 0
    %615 = vmatpush1.bf16.msra.mxu0 0
    %616 = vmatprep.subr.bf16.mxu0 0
    %617 = vmatpush1.bf16.msra.mxu0 0
    %618 = vmatprep.subr.bf16.mxu0 0
    %619 = vmatpush1.bf16.msra.mxu0 0
    %620 = vmatprep.subr.bf16.mxu0 0
    %621 = vmatpush1.bf16.msra.mxu0 0
    %622 = vmatprep.subr.bf16.mxu0 0
    %623 = vmatpush1.bf16.msra.mxu0 0
    %624 = vmatprep.subr.bf16.mxu0 0
    %625 = vmatpush1.bf16.msra.mxu0 0
    %626 = vmatprep.subr.bf16.mxu0 0
    %627 = vmatpush1.bf16.msra.mxu0 0
    %628 = vmatprep.mubr.bf16.mxu0 0
    %629 = vmatmul.mubr.bf16.gmra.mrb[0].mxu0 %v524
    %v630 = vpop.f32.mrb[0].mxu0
    %v631 = vadd.f32 %v546, %v630
    %v632 = vpop.f32.mrb[0].mxu0
    %v633 = vpop.f32.mrb[0].mxu0
    %v634 = vpop.f32.mrb[0].mxu0
    %635 = vdwg.mxu0
    %636 = vst [vmem:[#allocation19] sm:$0xff] %v631
    // Predicated region
    $region74: #{tpu_custom_call.1} parent=1 // pred_check
      _
    $region75: #{tpu_custom_call.1} parent=1 // pred_check_branch
      %638 = sbr.rel (0) target = $region77
    $region76: #{tpu_custom_call.1} parent=1 // pred_region
      %s640 = ssub.s32 128, 128
      %641 = vsyncadd [#allocation6], %s640
      %s643 = sshll.u32 [#allocation19], 4
      %s644 = int_to_ptr.vmem [resolvable:$true] %s643
      %646 = dma.vmem_to_hbm [thread:$0]  %s644, 128, %s10, [#allocation6]
    $region77: #{tpu_custom_call.1} parent=1 // pred_fallthru
      _
    // Predicated region
    $region78: #{tpu_custom_call.1} parent=1 // pred_check
      _
    $region79: #{tpu_custom_call.1} parent=1 // pred_check_branch
      %648 = sbr.rel (0) target = $region81
    $region80: #{tpu_custom_call.1} parent=1 // pred_region
      %649 = dma.done [#allocation6], 128
    $region81: #{tpu_custom_call.1} parent=1 // pred_fallthru
      _
    %650 = vsyncpa [#allocation5], 1
    %651 = vsyncpa [#allocation8], 1
    %652 = vsyncpa [#allocation11], 1
    %653 = vsyncpa [#allocation14], 1
    %654 = vsyncpa [#allocation17], 1
    %655 = vsyncpa [#allocation6], 1

</llo_original>
